<compile_context>
chip_gen: v6e
topology: v6e:2x2x1
jax: 0.10.0
libtpu: 0.0.40
codegen_flags: <defaults>
</compile_context>

<pallas_src>
import functools

import jax
import jax.numpy as jnp
from jax.experimental import pallas as pl
from jax.experimental.pallas import tpu as pltpu

_INV_SQRT2 = 0.7071067811865476
_VMEM_LIMIT = 48 * 1024 * 1024        # <= v7x 64 MiB physical; fine on v5e/v6e
_MAX_TILE_L = 2048                    # lane-tile cap (multiple of 128)


def _gelu_exact(y):
    """Exact (erf) GELU, matching nn.GELU() default."""
    return 0.5 * y * (1.0 + jax.lax.erf(y * jnp.float32(_INV_SQRT2)))


def _conv_gelu_tile(x_ref, w_ref, b_ref, *, kk, tl, stride, c_in):
    """GELU(Conv1d) for one (C_out_p, tl) tile.

    x_ref : (C_in, win_len) halo window, win_len = (tl-1)*stride + K
    w_ref : (K, C_out_p, C_in) per-tap weight slabs (resident)
    b_ref : (C_out_p, 1) conv bias (resident)
    """
    xw = x_ref[...]
    acc = None
    for k in range(kk):                       # K accumulating MXU dots
        if stride == 1:
            xs = jax.lax.slice_in_dim(xw, k, k + tl, axis=1)
        else:
            xs = jax.lax.slice(xw, (0, k), (c_in, k + (tl - 1) * stride + 1),
                               (1, stride))
        d = jnp.dot(w_ref[k], xs, preferred_element_type=jnp.float32)
        acc = d if acc is None else acc + d
    return _gelu_exact(acc + b_ref[...])      # (C_out_p, tl)


def _stats_kernel(x_ref, w_ref, b_ref, sum_ref, ssq_ref, *,
                  kk, tl, stride, c_in, lw, n_tiles_l, valid_last):
    """Pass 1 (stats only): accumulate per-channel sum / sum-of-squares of the
    GELU activations into lane-wide resident accumulators (one slot per batch
    element, so the batch grid axis can be 'parallel' on v7x)."""
    j = pl.program_id(1)

    @pl.when(j == 0)
    def _():
        sum_ref[...] = jnp.zeros_like(sum_ref)
        ssq_ref[...] = jnp.zeros_like(ssq_ref)

    g = _conv_gelu_tile(x_ref, w_ref, b_ref, kk=kk, tl=tl, stride=stride,
                        c_in=c_in)

    def _accumulate(vals):
        s = None
        q = None
        for c in range(tl // lw):             # lane-aligned VALU adds, no XLU reduce
            ch = jax.lax.slice_in_dim(vals, c * lw, (c + 1) * lw, axis=1)
            s = ch if s is None else s + ch
            q = ch * ch if q is None else q + ch * ch
        sum_ref[...] += s
        ssq_ref[...] += q

    if valid_last == tl:                      # no lane padding anywhere (static)
        _accumulate(g)
    else:                                     # pay the mask only on the final tile
        @pl.when(j == n_tiles_l - 1)
        def _():
            col = jax.lax.broadcasted_iota(jnp.int32, g.shape, 1)
            _accumulate(jnp.where(col < valid_last, g, 0.0))

        @pl.when(j != n_tiles_l - 1)
        def _():
            _accumulate(g)


def _apply_kernel(x_ref, w_ref, b_ref, scale_ref, shift_ref, o_ref, *,
                  kk, tl, stride, c_in):
    """Pass 2: recompute conv+GELU (cheap) and apply the precomputed BatchNorm
    affine; stores directly in (N, C_out, L_out) layout."""
    g = _conv_gelu_tile(x_ref, w_ref, b_ref, kk=kk, tl=tl, stride=stride,
                        c_in=c_in)
    o_ref[...] = (g * scale_ref[...] + shift_ref[...]).astype(o_ref.dtype)


def basic_block(x, weight, bias, gamma, beta, *, stride, padding, eps=1e-5):
    """x: (N, C_in, L); weight: (C_out, C_in, K); bias/gamma/beta: (C_out,)."""
    N, C_in, L = x.shape
    C_out, _, K = weight.shape
    L_out = (L + 2 * padding - K) // stride + 1
    M = N * L_out
    f32 = jnp.float32

    # ---- static tiling over L_out (batch is its own grid axis) --------------
    T_L = L_out if L_out <= _MAX_TILE_L else _MAX_TILE_L
    n_tiles_l = pl.cdiv(L_out, T_L)
    L_out_pad = n_tiles_l * T_L
    valid_last = L_out - (n_tiles_l - 1) * T_L      # valid columns in last tile
    LW = 128 if T_L % 128 == 0 else T_L             # accumulator lane width
    win_len = (T_L - 1) * stride + K                # halo window per tile
    C_out_p = 8 * pl.cdiv(C_out, 8)                 # f32 sublane alignment

    # ---- glue (fused by XLA under jit): pad + per-tile halo windows ---------
    L_need = (L_out_pad - 1) * stride + K
    x_p = jnp.pad(x.astype(f32),
                  ((0, 0), (0, 0), (padding, max(0, L_need - L - padding))))
    x_p = jax.lax.slice_in_dim(x_p, 0, L_need, axis=2)
    x_tiles = jnp.stack(
        [jax.lax.slice_in_dim(x_p, j * T_L * stride,
                              j * T_L * stride + win_len, axis=2)
         for j in range(n_tiles_l)], axis=1)        # (N, n_tiles, C_in, win_len)

    w_k = jnp.transpose(
        jnp.pad(weight.astype(f32), ((0, C_out_p - C_out), (0, 0), (0, 0))),
        (2, 0, 1))                                  # (K, C_out_p, C_in)
    b_p = jnp.pad(bias.astype(f32), (0, C_out_p - C_out)).reshape(C_out_p, 1)

    x_spec = pl.BlockSpec((None, None, C_in, win_len), lambda n, j: (n, j, 0, 0))
    w_spec = pl.BlockSpec((K, C_out_p, C_in), lambda n, j: (0, 0, 0))
    v_spec = pl.BlockSpec((C_out_p, 1), lambda n, j: (0, 0))

    # ---- Pass 1: stats only (no activation slab written to HBM) -------------
    psum, pssq = pl.pallas_call(
        functools.partial(_stats_kernel, kk=K, tl=T_L, stride=stride, c_in=C_in,
                          lw=LW, n_tiles_l=n_tiles_l, valid_last=valid_last),
        grid=(N, n_tiles_l),
        in_specs=[x_spec, w_spec, v_spec],
        out_specs=[pl.BlockSpec((None, C_out_p, LW), lambda n, j: (n, 0, 0)),
                   pl.BlockSpec((None, C_out_p, LW), lambda n, j: (n, 0, 0))],
        out_shape=(jax.ShapeDtypeStruct((N, C_out_p, LW), f32),
                   jax.ShapeDtypeStruct((N, C_out_p, LW), f32)),
        compiler_params=pltpu.CompilerParams(
            dimension_semantics=("parallel", "arbitrary"),   # batch -> both v7x TCs
            vmem_limit_bytes=_VMEM_LIMIT),
    )(x_tiles, w_k, b_p)

    # ---- BN statistics -> scale/shift, computed exactly once (tiny) ---------
    sum_c = jnp.sum(psum, axis=(0, 2))[:C_out]
    ssq_c = jnp.sum(pssq, axis=(0, 2))[:C_out]
    mean = sum_c / M
    var = jnp.maximum(ssq_c / M - mean * mean, 0.0)   # biased batch variance
    scale = gamma.astype(f32) * jax.lax.rsqrt(var + f32(eps))
    shift = beta.astype(f32) - mean * scale
    scale_p = jnp.pad(scale, (0, C_out_p - C_out)).reshape(C_out_p, 1)
    shift_p = jnp.pad(shift, (0, C_out_p - C_out)).reshape(C_out_p, 1)
    # TODO(synk): running_mean / running_var buffer updates are stateful and are
    # not emitted by this stateless kernel (forward math matches training mode).

    # ---- Pass 2: recompute conv+GELU, fused BN affine, direct layout store --
    out_p = pl.pallas_call(
        functools.partial(_apply_kernel, kk=K, tl=T_L, stride=stride, c_in=C_in),
        grid=(N, n_tiles_l),
        in_specs=[x_spec, w_spec, v_spec, v_spec, v_spec],
        out_specs=pl.BlockSpec((None, C_out_p, T_L), lambda n, j: (n, 0, j)),
        out_shape=jax.ShapeDtypeStruct((N, C_out_p, L_out_pad), x.dtype),
        compiler_params=pltpu.CompilerParams(
            dimension_semantics=("parallel", "parallel"),
            vmem_limit_bytes=_VMEM_LIMIT),
    )(x_tiles, w_k, b_p, scale_p, shift_p)

    return out_p[:, :C_out, :L_out]


def _reference(x, weight, bias, gamma, beta, *, stride, padding, eps=1e-5):
    """Pure-JAX reference mirroring the PyTorch forward."""
    y = jax.lax.conv_general_dilated(
        x, weight, window_strides=(stride,), padding=[(padding, padding)],
        dimension_numbers=("NCH", "OIH", "NCH"))
    y = y + bias[None, :, None]
    g = jax.nn.gelu(y, approximate=False)
    mean = jnp.mean(g, axis=(0, 2), keepdims=True)
    var = jnp.mean((g - mean) ** 2, axis=(0, 2), keepdims=True)
    return ((g - mean) / jnp.sqrt(var + eps) * gamma[None, :, None]
            + beta[None, :, None])


if __name__ == "__main__":
    # Shapes consistent with Basic_Block(in=4, out=8, k=3, stride=1, pad=1)
    N, C_in, C_out, L, K, stride, padding = 2, 4, 8, 16, 3, 1, 1
    L_out = (L + 2 * padding - K) // stride + 1

    key = jax.random.PRNGKey(0)
    kx, kw, kb, kg, kbt = jax.random.split(key, 5)
    x = jax.random.normal(kx, (N, C_in, L), dtype=jnp.float32)
    weight = 0.1 * jax.random.normal(kw, (C_out, C_in, K), dtype=jnp.float32)
    bias = 0.1 * jax.random.normal(kb, (C_out,), dtype=jnp.float32)
    gamma = 1.0 + 0.1 * jax.random.normal(kg, (C_out,), dtype=jnp.float32)
    beta = 0.1 * jax.random.normal(kbt, (C_out,), dtype=jnp.float32)

    fwd = jax.jit(functools.partial(basic_block, stride=stride, padding=padding))
    out = jax.block_until_ready(fwd(x, weight, bias, gamma, beta))

    ref = _reference(x, weight, bias, gamma, beta, stride=stride, padding=padding)
    assert out.shape == (N, C_out, L_out)
    assert jnp.allclose(out, ref, rtol=1e-4, atol=1e-4), "mismatch vs reference"

    print("KERNEL_OK")
</pallas_src>

<mosaic_0001>
module attributes {stable_mosaic.version = 11 : i64} {
  func.func @_stats_kernel(%arg0: i32, %arg1: i32, %arg2: memref<1x1x4x18xf32, #tpu.memory_space<vmem>>, %arg3: memref<3x8x4xf32, #tpu.memory_space<vmem>>, %arg4: memref<8x1xf32, #tpu.memory_space<vmem>>, %arg5: memref<1x8x16xf32, #tpu.memory_space<vmem>>, %arg6: memref<1x8x16xf32, #tpu.memory_space<vmem>>) attributes {dimension_semantics = [#tpu.dimension_semantics<parallel>, #tpu.dimension_semantics<arbitrary>], iteration_bounds = array<i64: 2, 1>, scalar_prefetch = 0 : i64, scratch_operands = 0 : i64, tpu.core_type = #tpu.core_type<tc>, window_params = [{transform_indices = @transform_0, window_bounds = array<i64: 1, 1, 4, 18>}, {pipeline_mode = #tpu.pipeline_mode<synchronous>, transform_indices = @transform_1, window_bounds = array<i64: 3, 8, 4>}, {pipeline_mode = #tpu.pipeline_mode<synchronous>, transform_indices = @transform_2, window_bounds = array<i64: 8, 1>}, {transform_indices = @transform_3, window_bounds = array<i64: 1, 8, 16>}, {transform_indices = @transform_4, window_bounds = array<i64: 1, 8, 16>}]} {
    %c0_i32 = arith.constant 0 : i32
    %0 = arith.cmpi eq, %arg1, %c0_i32 : i32
    %1 = arith.extui %0 : i1 to i32
    %c0_i32_0 = arith.constant 0 : i32
    %2 = arith.cmpi ne, %1, %c0_i32_0 : i32
    scf.if %2 {
      %cst_30 = arith.constant 0.000000e+00 : f32
      %44 = vector.broadcast %cst_30 : f32 to vector<8x16xf32>
      %c0_31 = arith.constant 0 : index
      %c0_32 = arith.constant 0 : index
      %c0_33 = arith.constant 0 : index
      %45 = vector.load %arg5[%c0_31, %c0_32, %c0_33] : memref<1x8x16xf32, #tpu.memory_space<vmem>>, vector<1x8x16xf32>
      %46 = vector.shape_cast %45 : vector<1x8x16xf32> to vector<8x16xf32>
      %47 = vector.shape_cast %44 : vector<8x16xf32> to vector<1x8x16xf32>
      tpu.vector_store %arg5[%c0_31, %c0_32, %c0_33], %47 {strides = array<i32>} : memref<1x8x16xf32, #tpu.memory_space<vmem>>, vector<1x8x16xf32>,
      %cst_34 = arith.constant 0.000000e+00 : f32
      %48 = vector.broadcast %cst_34 : f32 to vector<8x16xf32>
      %c0_35 = arith.constant 0 : index
      %c0_36 = arith.constant 0 : index
      %c0_37 = arith.constant 0 : index
      %49 = vector.load %arg6[%c0_35, %c0_36, %c0_37] : memref<1x8x16xf32, #tpu.memory_space<vmem>>, vector<1x8x16xf32>
      %50 = vector.shape_cast %49 : vector<1x8x16xf32> to vector<8x16xf32>
      %51 = vector.shape_cast %48 : vector<8x16xf32> to vector<1x8x16xf32>
      tpu.vector_store %arg6[%c0_35, %c0_36, %c0_37], %51 {strides = array<i32>} : memref<1x8x16xf32, #tpu.memory_space<vmem>>, vector<1x8x16xf32>,
    } else {
    }
    %c0 = arith.constant 0 : index
    %c0_1 = arith.constant 0 : index
    %c0_2 = arith.constant 0 : index
    %c0_3 = arith.constant 0 : index
    %3 = vector.load %arg2[%c0, %c0_1, %c0_2, %c0_3] : memref<1x1x4x18xf32, #tpu.memory_space<vmem>>, vector<1x1x4x18xf32>
    %4 = vector.shape_cast %3 : vector<1x1x4x18xf32> to vector<4x18xf32>
    %5 = vector.extract_strided_slice %4 {offsets = [0, 0], sizes = [4, 16], strides = [1, 1]} : vector<4x18xf32> to vector<4x16xf32>
    %c0_4 = arith.constant 0 : index
    %c0_5 = arith.constant 0 : index
    %c0_6 = arith.constant 0 : index
    %6 = vector.load %arg3[%c0_4, %c0_5, %c0_6] : memref<3x8x4xf32, #tpu.memory_space<vmem>>, vector<1x8x4xf32>
    %7 = vector.shape_cast %6 : vector<1x8x4xf32> to vector<8x4xf32>
    %cst = arith.constant dense<0.000000e+00> : vector<8x16xf32>
    %8 = tpu.matmul %7, %5, %cst {dimension_numbers = #tpu.dot_dimension_numbers<[1], [0], [0], [1], [0, 0, 1, 1], [], []>} : vector<8x4xf32>, vector<4x16xf32>, vector<8x16xf32> -> vector<8x16xf32>
    %9 = vector.extract_strided_slice %4 {offsets = [0, 1], sizes = [4, 16], strides = [1, 1]} : vector<4x18xf32> to vector<4x16xf32>
    %c1 = arith.constant 1 : index
    %c0_7 = arith.constant 0 : index
    %c0_8 = arith.constant 0 : index
    %10 = vector.load %arg3[%c1, %c0_7, %c0_8] : memref<3x8x4xf32, #tpu.memory_space<vmem>>, vector<1x8x4xf32>
    %11 = vector.shape_cast %10 : vector<1x8x4xf32> to vector<8x4xf32>
    %cst_9 = arith.constant dense<0.000000e+00> : vector<8x16xf32>
    %12 = tpu.matmul %11, %9, %cst_9 {dimension_numbers = #tpu.dot_dimension_numbers<[1], [0], [0], [1], [0, 0, 1, 1], [], []>} : vector<8x4xf32>, vector<4x16xf32>, vector<8x16xf32> -> vector<8x16xf32>
    %13 = arith.addf %8, %12 : vector<8x16xf32>
    %14 = vector.extract_strided_slice %4 {offsets = [0, 2], sizes = [4, 16], strides = [1, 1]} : vector<4x18xf32> to vector<4x16xf32>
    %c2 = arith.constant 2 : index
    %c0_10 = arith.constant 0 : index
    %c0_11 = arith.constant 0 : index
    %15 = vector.load %arg3[%c2, %c0_10, %c0_11] : memref<3x8x4xf32, #tpu.memory_space<vmem>>, vector<1x8x4xf32>
    %16 = vector.shape_cast %15 : vector<1x8x4xf32> to vector<8x4xf32>
    %cst_12 = arith.constant dense<0.000000e+00> : vector<8x16xf32>
    %17 = tpu.matmul %16, %14, %cst_12 {dimension_numbers = #tpu.dot_dimension_numbers<[1], [0], [0], [1], [0, 0, 1, 1], [], []>} : vector<8x4xf32>, vector<4x16xf32>, vector<8x16xf32> -> vector<8x16xf32>
    %18 = arith.addf %13, %17 : vector<8x16xf32>
    %c0_13 = arith.constant 0 : index
    %c0_14 = arith.constant 0 : index
    %19 = vector.load %arg4[%c0_13, %c0_14] : memref<8x1xf32, #tpu.memory_space<vmem>>, vector<8x1xf32>
    %20 = vector.broadcast %19 : vector<8x1xf32> to vector<8x16xf32>
    %21 = arith.addf %18, %20 : vector<8x16xf32>
    %cst_15 = arith.constant 5.000000e-01 : f32
    %22 = vector.broadcast %cst_15 : f32 to vector<8x16xf32>
    %23 = arith.mulf %22, %21 : vector<8x16xf32>
    %cst_16 = arith.constant 0.707106769 : f32
    %24 = vector.broadcast %cst_16 : f32 to vector<8x16xf32>
    %25 = arith.mulf %21, %24 : vector<8x16xf32>
    %26 = math.erf %25 : vector<8x16xf32>
    %cst_17 = arith.constant 1.000000e+00 : f32
    %27 = vector.broadcast %cst_17 : f32 to vector<8x16xf32>
    %28 = arith.addf %27, %26 : vector<8x16xf32>
    %29 = arith.mulf %23, %28 : vector<8x16xf32>
    %30 = vector.extract_strided_slice %29 {offsets = [0, 0], sizes = [8, 16], strides = [1, 1]} : vector<8x16xf32> to vector<8x16xf32>
    %31 = arith.mulf %30, %30 : vector<8x16xf32>
    %c0_18 = arith.constant 0 : index
    %c0_19 = arith.constant 0 : index
    %c0_20 = arith.constant 0 : index
    %32 = vector.load %arg5[%c0_18, %c0_19, %c0_20] : memref<1x8x16xf32, #tpu.memory_space<vmem>>, vector<1x8x16xf32>
    %33 = vector.shape_cast %32 : vector<1x8x16xf32> to vector<8x16xf32>
    %34 = arith.addf %33, %30 : vector<8x16xf32>
    %c0_21 = arith.constant 0 : index
    %c0_22 = arith.constant 0 : index
    %c0_23 = arith.constant 0 : index
    %35 = vector.load %arg5[%c0_21, %c0_22, %c0_23] : memref<1x8x16xf32, #tpu.memory_space<vmem>>, vector<1x8x16xf32>
    %36 = vector.shape_cast %35 : vector<1x8x16xf32> to vector<8x16xf32>
    %37 = vector.shape_cast %34 : vector<8x16xf32> to vector<1x8x16xf32>
    tpu.vector_store %arg5[%c0_21, %c0_22, %c0_23], %37 {strides = array<i32>} : memref<1x8x16xf32, #tpu.memory_space<vmem>>, vector<1x8x16xf32>,
    %c0_24 = arith.constant 0 : index
    %c0_25 = arith.constant 0 : index
    %c0_26 = arith.constant 0 : index
    %38 = vector.load %arg6[%c0_24, %c0_25, %c0_26] : memref<1x8x16xf32, #tpu.memory_space<vmem>>, vector<1x8x16xf32>
    %39 = vector.shape_cast %38 : vector<1x8x16xf32> to vector<8x16xf32>
    %40 = arith.addf %39, %31 : vector<8x16xf32>
    %c0_27 = arith.constant 0 : index
    %c0_28 = arith.constant 0 : index
    %c0_29 = arith.constant 0 : index
    %41 = vector.load %arg6[%c0_27, %c0_28, %c0_29] : memref<1x8x16xf32, #tpu.memory_space<vmem>>, vector<1x8x16xf32>
    %42 = vector.shape_cast %41 : vector<1x8x16xf32> to vector<8x16xf32>
    %43 = vector.shape_cast %40 : vector<8x16xf32> to vector<1x8x16xf32>
    tpu.vector_store %arg6[%c0_27, %c0_28, %c0_29], %43 {strides = array<i32>} : memref<1x8x16xf32, #tpu.memory_space<vmem>>, vector<1x8x16xf32>,
    return
  }
  func.func @transform_0(%arg0: i32, %arg1: i32) -> (i32, i32, i32, i32) {
    %c0_i32 = arith.constant 0 : i32
    %c0_i32_0 = arith.constant 0 : i32
    %c0_i32_1 = arith.constant 0 : i32
    return %arg0, %arg1, %c0_i32, %c0_i32_0 : i32, i32, i32, i32
  }
  func.func @transform_1(%arg0: i32, %arg1: i32) -> (i32, i32, i32) {
    %c0_i32 = arith.constant 0 : i32
    %c0_i32_0 = arith.constant 0 : i32
    %c0_i32_1 = arith.constant 0 : i32
    %c0_i32_2 = arith.constant 0 : i32
    return %c0_i32, %c0_i32_0, %c0_i32_1 : i32, i32, i32
  }
  func.func @transform_2(%arg0: i32, %arg1: i32) -> (i32, i32) {
    %c0_i32 = arith.constant 0 : i32
    %c0_i32_0 = arith.constant 0 : i32
    %c0_i32_1 = arith.constant 0 : i32
    return %c0_i32, %c0_i32_0 : i32, i32
  }
  func.func @transform_3(%arg0: i32, %arg1: i32) -> (i32, i32, i32) {
    %c0_i32 = arith.constant 0 : i32
    %c0_i32_0 = arith.constant 0 : i32
    %c0_i32_1 = arith.constant 0 : i32
    return %arg0, %c0_i32, %c0_i32_0 : i32, i32, i32
  }
  func.func @transform_4(%arg0: i32, %arg1: i32) -> (i32, i32, i32) {
    %c0_i32 = arith.constant 0 : i32
    %c0_i32_0 = arith.constant 0 : i32
    %c0_i32_1 = arith.constant 0 : i32
    return %arg0, %c0_i32, %c0_i32_0 : i32, i32, i32
  }
}

module attributes {stable_mosaic.version = 11 : i64} {
  func.func @_apply_kernel(%arg0: i32, %arg1: i32, %arg2: memref<1x1x4x18xf32, #tpu.memory_space<vmem>>, %arg3: memref<3x8x4xf32, #tpu.memory_space<vmem>>, %arg4: memref<8x1xf32, #tpu.memory_space<vmem>>, %arg5: memref<8x1xf32, #tpu.memory_space<vmem>>, %arg6: memref<8x1xf32, #tpu.memory_space<vmem>>, %arg7: memref<1x8x16xf32, #tpu.memory_space<vmem>>) attributes {dimension_semantics = [#tpu.dimension_semantics<parallel>, #tpu.dimension_semantics<parallel>], iteration_bounds = array<i64: 2, 1>, scalar_prefetch = 0 : i64, scratch_operands = 0 : i64, tpu.core_type = #tpu.core_type<tc>, window_params = [{transform_indices = @transform_0, window_bounds = array<i64: 1, 1, 4, 18>}, {pipeline_mode = #tpu.pipeline_mode<synchronous>, transform_indices = @transform_1, window_bounds = array<i64: 3, 8, 4>}, {pipeline_mode = #tpu.pipeline_mode<synchronous>, transform_indices = @transform_2, window_bounds = array<i64: 8, 1>}, {pipeline_mode = #tpu.pipeline_mode<synchronous>, transform_indices = @transform_3, window_bounds = array<i64: 8, 1>}, {pipeline_mode = #tpu.pipeline_mode<synchronous>, transform_indices = @transform_4, window_bounds = array<i64: 8, 1>}, {transform_indices = @transform_5, window_bounds = array<i64: 1, 8, 16>}]} {
    %c0 = arith.constant 0 : index
    %c0_0 = arith.constant 0 : index
    %c0_1 = arith.constant 0 : index
    %c0_2 = arith.constant 0 : index
    %0 = vector.load %arg2[%c0, %c0_0, %c0_1, %c0_2] : memref<1x1x4x18xf32, #tpu.memory_space<vmem>>, vector<1x1x4x18xf32>
    %1 = vector.shape_cast %0 : vector<1x1x4x18xf32> to vector<4x18xf32>
    %2 = vector.extract_strided_slice %1 {offsets = [0, 0], sizes = [4, 16], strides = [1, 1]} : vector<4x18xf32> to vector<4x16xf32>
    %c0_3 = arith.constant 0 : index
    %c0_4 = arith.constant 0 : index
    %c0_5 = arith.constant 0 : index
    %3 = vector.load %arg3[%c0_3, %c0_4, %c0_5] : memref<3x8x4xf32, #tpu.memory_space<vmem>>, vector<1x8x4xf32>
    %4 = vector.shape_cast %3 : vector<1x8x4xf32> to vector<8x4xf32>
    %cst = arith.constant dense<0.000000e+00> : vector<8x16xf32>
    %5 = tpu.matmul %4, %2, %cst {dimension_numbers = #tpu.dot_dimension_numbers<[1], [0], [0], [1], [0, 0, 1, 1], [], []>} : vector<8x4xf32>, vector<4x16xf32>, vector<8x16xf32> -> vector<8x16xf32>
    %6 = vector.extract_strided_slice %1 {offsets = [0, 1], sizes = [4, 16], strides = [1, 1]} : vector<4x18xf32> to vector<4x16xf32>
    %c1 = arith.constant 1 : index
    %c0_6 = arith.constant 0 : index
    %c0_7 = arith.constant 0 : index
    %7 = vector.load %arg3[%c1, %c0_6, %c0_7] : memref<3x8x4xf32, #tpu.memory_space<vmem>>, vector<1x8x4xf32>
    %8 = vector.shape_cast %7 : vector<1x8x4xf32> to vector<8x4xf32>
    %cst_8 = arith.constant dense<0.000000e+00> : vector<8x16xf32>
    %9 = tpu.matmul %8, %6, %cst_8 {dimension_numbers = #tpu.dot_dimension_numbers<[1], [0], [0], [1], [0, 0, 1, 1], [], []>} : vector<8x4xf32>, vector<4x16xf32>, vector<8x16xf32> -> vector<8x16xf32>
    %10 = arith.addf %5, %9 : vector<8x16xf32>
    %11 = vector.extract_strided_slice %1 {offsets = [0, 2], sizes = [4, 16], strides = [1, 1]} : vector<4x18xf32> to vector<4x16xf32>
    %c2 = arith.constant 2 : index
    %c0_9 = arith.constant 0 : index
    %c0_10 = arith.constant 0 : index
    %12 = vector.load %arg3[%c2, %c0_9, %c0_10] : memref<3x8x4xf32, #tpu.memory_space<vmem>>, vector<1x8x4xf32>
    %13 = vector.shape_cast %12 : vector<1x8x4xf32> to vector<8x4xf32>
    %cst_11 = arith.constant dense<0.000000e+00> : vector<8x16xf32>
    %14 = tpu.matmul %13, %11, %cst_11 {dimension_numbers = #tpu.dot_dimension_numbers<[1], [0], [0], [1], [0, 0, 1, 1], [], []>} : vector<8x4xf32>, vector<4x16xf32>, vector<8x16xf32> -> vector<8x16xf32>
    %15 = arith.addf %10, %14 : vector<8x16xf32>
    %c0_12 = arith.constant 0 : index
    %c0_13 = arith.constant 0 : index
    %16 = vector.load %arg4[%c0_12, %c0_13] : memref<8x1xf32, #tpu.memory_space<vmem>>, vector<8x1xf32>
    %17 = vector.broadcast %16 : vector<8x1xf32> to vector<8x16xf32>
    %18 = arith.addf %15, %17 : vector<8x16xf32>
    %cst_14 = arith.constant 5.000000e-01 : f32
    %19 = vector.broadcast %cst_14 : f32 to vector<8x16xf32>
    %20 = arith.mulf %19, %18 : vector<8x16xf32>
    %cst_15 = arith.constant 0.707106769 : f32
    %21 = vector.broadcast %cst_15 : f32 to vector<8x16xf32>
    %22 = arith.mulf %18, %21 : vector<8x16xf32>
    %23 = math.erf %22 : vector<8x16xf32>
    %cst_16 = arith.constant 1.000000e+00 : f32
    %24 = vector.broadcast %cst_16 : f32 to vector<8x16xf32>
    %25 = arith.addf %24, %23 : vector<8x16xf32>
    %26 = arith.mulf %20, %25 : vector<8x16xf32>
    %c0_17 = arith.constant 0 : index
    %c0_18 = arith.constant 0 : index
    %27 = vector.load %arg5[%c0_17, %c0_18] : memref<8x1xf32, #tpu.memory_space<vmem>>, vector<8x1xf32>
    %28 = vector.broadcast %27 : vector<8x1xf32> to vector<8x16xf32>
    %29 = arith.mulf %26, %28 : vector<8x16xf32>
    %c0_19 = arith.constant 0 : index
    %c0_20 = arith.constant 0 : index
    %30 = vector.load %arg6[%c0_19, %c0_20] : memref<8x1xf32, #tpu.memory_space<vmem>>, vector<8x1xf32>
    %31 = vector.broadcast %30 : vector<8x1xf32> to vector<8x16xf32>
    %32 = arith.addf %29, %31 : vector<8x16xf32>
    %c0_21 = arith.constant 0 : index
    %c0_22 = arith.constant 0 : index
    %c0_23 = arith.constant 0 : index
    %33 = vector.load %arg7[%c0_21, %c0_22, %c0_23] : memref<1x8x16xf32, #tpu.memory_space<vmem>>, vector<1x8x16xf32>
    %34 = vector.shape_cast %33 : vector<1x8x16xf32> to vector<8x16xf32>
    %35 = vector.shape_cast %32 : vector<8x16xf32> to vector<1x8x16xf32>
    tpu.vector_store %arg7[%c0_21, %c0_22, %c0_23], %35 {strides = array<i32>} : memref<1x8x16xf32, #tpu.memory_space<vmem>>, vector<1x8x16xf32>,
    return
  }
  func.func @transform_0(%arg0: i32, %arg1: i32) -> (i32, i32, i32, i32) {
    %c0_i32 = arith.constant 0 : i32
    %c0_i32_0 = arith.constant 0 : i32
    %c0_i32_1 = arith.constant 0 : i32
    return %arg0, %arg1, %c0_i32, %c0_i32_0 : i32, i32, i32, i32
  }
  func.func @transform_1(%arg0: i32, %arg1: i32) -> (i32, i32, i32) {
    %c0_i32 = arith.constant 0 : i32
    %c0_i32_0 = arith.constant 0 : i32
    %c0_i32_1 = arith.constant 0 : i32
    %c0_i32_2 = arith.constant 0 : i32
    return %c0_i32, %c0_i32_0, %c0_i32_1 : i32, i32, i32
  }
  func.func @transform_2(%arg0: i32, %arg1: i32) -> (i32, i32) {
    %c0_i32 = arith.constant 0 : i32
    %c0_i32_0 = arith.constant 0 : i32
    %c0_i32_1 = arith.constant 0 : i32
    return %c0_i32, %c0_i32_0 : i32, i32
  }
  func.func @transform_3(%arg0: i32, %arg1: i32) -> (i32, i32) {
    %c0_i32 = arith.constant 0 : i32
    %c0_i32_0 = arith.constant 0 : i32
    %c0_i32_1 = arith.constant 0 : i32
    return %c0_i32, %c0_i32_0 : i32, i32
  }
  func.func @transform_4(%arg0: i32, %arg1: i32) -> (i32, i32) {
    %c0_i32 = arith.constant 0 : i32
    %c0_i32_0 = arith.constant 0 : i32
    %c0_i32_1 = arith.constant 0 : i32
    return %c0_i32, %c0_i32_0 : i32, i32
  }
  func.func @transform_5(%arg0: i32, %arg1: i32) -> (i32, i32, i32) {
    %c0_i32 = arith.constant 0 : i32
    %c0_i32_0 = arith.constant 0 : i32
    return %arg0, %c0_i32, %arg1 : i32, i32, i32
  }
}

</mosaic_0001>

<llo_original>
// kernel: basic_block.3
$region0: #{basic_block.3}
  #allocation0 [shape = 'u32[]', space=smem, size = 0x4, offset = 0x4, fixed_abs, tag = 'smem constant byte address 0x4 - core index']
  #allocation1 [shape = 'u32[144,128]{1,0:T(1,128)}', space=vmem, size = 0x12000, scoped, tag = 'internal scratch']
  %s0 = inlined_call_operand.vmem [shape: f32[2,1,4,18], index: 0, kind: input, shape index: {}]
  %s1 = inlined_call_operand.vmem [shape: f32[3,8,4], index: 1, kind: input, shape index: {}]
  %s2 = inlined_call_operand.vmem [shape: f32[8,1], index: 2, kind: input, shape index: {}]
  %s3 = inlined_call_operand.vmem [shape: f32[8,1], index: 3, kind: input, shape index: {}]
  %s4 = inlined_call_operand.vmem [shape: f32[8,1], index: 4, kind: input, shape index: {}]
  %s5 = inlined_call_operand.hbm [shape: f32[2,8,16], index: 5, kind: output, shape index: {}]
  %s6 = sld [smem:[#allocation0]]
  $region53: #{basic_block.3} parent=0
    _
  %s8 = ssub.s32 1, %s6
  %s9 = scalar_select 0, %s8, %s6
  $region1: #{basic_block.3} parent=0
    #allocation2 [shape = 'u8[8192]{0}', space=vmem, size = 0x2000, scoped, tag = 'output window, operand 0']
    #allocation3 [shape = 's32[2]{0}', space=sflag, size = 0x8, scoped, tag = 'scoped memory for basic_block.3']
    %10 = vsyncpa [#allocation3], 0
    %s11 = scalar_lea.sflag [#allocation3], 1
    %12 = vsyncpa %s11, 0
    loop: start=0, step=1, limit=4
    $region2: #{basic_block.3} parent=1 // loop_pre_header
      _
    $region3: #{basic_block.3} parent=1 // loop_header
      %s14 = sphi 0, %s18
      %p15 = scmp.ge.s32.totalorder %s14, 4
      %s21 = sphi 0, %s33
      %s22 = sphi 0, %s29
      %s23 = sphi 0, %s21
      %s24 = sphi 0, %s22
      %s25 = sphi 0, %s23
      %s26 = sphi 0, %s24
      %s38 = sphi 0, %s40
      %s41 = sphi 0, %s38
      %s42 = sphi 0, %s41
      %s58 = sphi 0, %s42
      %s62 = sphi 0, %s62
      %s64 = sphi 0, %s62
      %s65 = sphi 0, %s64
      %s79 = sphi 0, %s65
      %s83 = sphi 0, %s83
      %s85 = sphi 0, %s83
      %s86 = sphi 0, %s85
      %s100 = sphi 0, %s86
      %s104 = sphi 0, %s104
      %s106 = sphi 0, %s104
      %s107 = sphi 0, %s106
      %s121 = sphi 0, %s107
      %s125 = sphi 0, %s125
      %s127 = sphi 0, %s125
      %s128 = sphi 0, %s127
      %s142 = sphi 0, %s128
      %s150 = sphi 0, %s152
      %s153 = sphi 0, %s150
      %s154 = sphi 0, %s153
      %s170 = sphi 0, %s154
    $region4: #{basic_block.3} parent=1 // loop_header_branch
      %17 = sbr.rel (%p15) target = $region8
    $region5: #{basic_block.3} parent=1 // loop_body
      %s19 = ssub.s32 %s14, 1
      %s20 = ssub.s32 %s14, 2
      %s27 = sadd.s32 1, %s22
      %p28 = scmp.ge.s32.totalorder %s27, 1
      %s29 = scalar_select %p28, 0, %s27
      %s30 = sadd.s32 1, %s21
      %s31 = scalar_select %p28, %s30, %s21
      %p32 = scmp.ge.s32.totalorder %s31, 2
      %s33 = scalar_select %p32, 0, %s31
      %s34 = ssub.s32 %s21, %s33
      %s35 = ssub.s32 %s22, %s29
      %s36 = sor.u32 %s34, %s35
      %p37 = scmp.eq.s32.totalorder %s36, 0
      %s39 = sadd.s32 %s38, 1
      %s40 = scalar_select %p37, %s38, %s39
      %p43 = pneg %p37
      %p44 = scmp.eq.s32.totalorder %s14, 1
      %p45 = por %p43, %p44
      %p46 = scmp.ne.s32.totalorder %s38, %s41
      %p47 = scmp.eq.s32.totalorder %s14, 0
      %p48 = por %p46, %p47
      %p49 = scmp.ne.s32.totalorder %s38, %s41
      %p50 = scmp.eq.s32.totalorder %s19, 1
      %p51 = por %p49, %p50
      %p52 = scmp.ne.s32.totalorder %s41, %s42
      %p53 = scmp.eq.s32.totalorder %s19, 0
      %p54 = por %p52, %p53
      %p55 = scmp.ne.s32.totalorder %s41, %s42
      %p56 = scmp.eq.s32.totalorder %s20, 1
      %p57 = por %p55, %p56
      %p59 = scmp.ne.s32.totalorder %s42, %s58
      %p60 = scmp.eq.s32.totalorder %s20, 0
      %p61 = por %p59, %p60
      %s63 = sadd.s32 %s62, 1
      %p66 = scmp.eq.s32.totalorder %s14, 1
      %p67 = scmp.ne.s32.totalorder %s62, %s64
      %p68 = scmp.eq.s32.totalorder %s14, 0
      %p69 = por %p67, %p68
      %p70 = scmp.ne.s32.totalorder %s62, %s64
      %p71 = scmp.eq.s32.totalorder %s19, 1
      %p72 = por %p70, %p71
      %p73 = scmp.ne.s32.totalorder %s64, %s65
      %p74 = scmp.eq.s32.totalorder %s19, 0
      %p75 = por %p73, %p74
      %p76 = scmp.ne.s32.totalorder %s64, %s65
      %p77 = scmp.eq.s32.totalorder %s20, 1
      %p78 = por %p76, %p77
      %p80 = scmp.ne.s32.totalorder %s65, %s79
      %p81 = scmp.eq.s32.totalorder %s20, 0
      %p82 = por %p80, %p81
      %s84 = sadd.s32 %s83, 1
      %p87 = scmp.eq.s32.totalorder %s14, 1
      %p88 = scmp.ne.s32.totalorder %s83, %s85
      %p89 = scmp.eq.s32.totalorder %s14, 0
      %p90 = por %p88, %p89
      %p91 = scmp.ne.s32.totalorder %s83, %s85
      %p92 = scmp.eq.s32.totalorder %s19, 1
      %p93 = por %p91, %p92
      %p94 = scmp.ne.s32.totalorder %s85, %s86
      %p95 = scmp.eq.s32.totalorder %s19, 0
      %p96 = por %p94, %p95
      %p97 = scmp.ne.s32.totalorder %s85, %s86
      %p98 = scmp.eq.s32.totalorder %s20, 1
      %p99 = por %p97, %p98
      %p101 = scmp.ne.s32.totalorder %s86, %s100
      %p102 = scmp.eq.s32.totalorder %s20, 0
      %p103 = por %p101, %p102
      %s105 = sadd.s32 %s104, 1
      %p108 = scmp.eq.s32.totalorder %s14, 1
      %p109 = scmp.ne.s32.totalorder %s104, %s106
      %p110 = scmp.eq.s32.totalorder %s14, 0
      %p111 = por %p109, %p110
      %p112 = scmp.ne.s32.totalorder %s104, %s106
      %p113 = scmp.eq.s32.totalorder %s19, 1
      %p114 = por %p112, %p113
      %p115 = scmp.ne.s32.totalorder %s106, %s107
      %p116 = scmp.eq.s32.totalorder %s19, 0
      %p117 = por %p115, %p116
      %p118 = scmp.ne.s32.totalorder %s106, %s107
      %p119 = scmp.eq.s32.totalorder %s20, 1
      %p120 = por %p118, %p119
      %p122 = scmp.ne.s32.totalorder %s107, %s121
      %p123 = scmp.eq.s32.totalorder %s20, 0
      %p124 = por %p122, %p123
      %s126 = sadd.s32 %s125, 1
      %p129 = scmp.eq.s32.totalorder %s14, 1
      %p130 = scmp.ne.s32.totalorder %s125, %s127
      %p131 = scmp.eq.s32.totalorder %s14, 0
      %p132 = por %p130, %p131
      %p133 = scmp.ne.s32.totalorder %s125, %s127
      %p134 = scmp.eq.s32.totalorder %s19, 1
      %p135 = por %p133, %p134
      %p136 = scmp.ne.s32.totalorder %s127, %s128
      %p137 = scmp.eq.s32.totalorder %s19, 0
      %p138 = por %p136, %p137
      %p139 = scmp.ne.s32.totalorder %s127, %s128
      %p140 = scmp.eq.s32.totalorder %s20, 1
      %p141 = por %p139, %p140
      %p143 = scmp.ne.s32.totalorder %s128, %s142
      %p144 = scmp.eq.s32.totalorder %s20, 0
      %p145 = por %p143, %p144
      %s146 = ssub.s32 %s21, %s33
      %s147 = ssub.s32 %s22, %s29
      %s148 = sor.u32 %s146, %s147
      %p149 = scmp.eq.s32.totalorder %s148, 0
      %s151 = sadd.s32 %s150, 1
      %s152 = scalar_select %p149, %s150, %s151
      %p155 = pneg %p149
      %p156 = scmp.eq.s32.totalorder %s14, 1
      %p157 = por %p155, %p156
      %p158 = scmp.ne.s32.totalorder %s150, %s153
      %p159 = scmp.eq.s32.totalorder %s14, 0
      %p160 = por %p158, %p159
      %p161 = scmp.ne.s32.totalorder %s150, %s153
      %p162 = scmp.eq.s32.totalorder %s19, 1
      %p163 = por %p161, %p162
      %p164 = scmp.ne.s32.totalorder %s153, %s154
      %p165 = scmp.eq.s32.totalorder %s19, 0
      %p166 = por %p164, %p165
      %p167 = scmp.ne.s32.totalorder %s153, %s154
      %p168 = scmp.eq.s32.totalorder %s20, 1
      %p169 = por %p167, %p168
      %p171 = scmp.ne.s32.totalorder %s154, %s170
      %p172 = scmp.eq.s32.totalorder %s20, 0
      %p173 = por %p171, %p172
      %p174 = scmp.le.s32.totalorder 1, %s14
      %p175 = scmp.lt.s32.totalorder %s14, 3
      %p176 = pnand %p174, %p175
      %p177 = pneg %p176
      // Predicated region
      $region9: #{basic_block.3} parent=5 // pred_check
        _
      $region10: #{basic_block.3} parent=5 // pred_check_branch
        %179 = sbr.rel (%p176) target = $region12
      $region11: #{basic_block.3} parent=5 // pred_region
        %s180 = ssub.s32 %s14, 1
        // Predicated region
        $region13: #{basic_block.3} parent=11 // pred_check
          %p181 = pneg %p75
        $region14: #{basic_block.3} parent=11 // pred_check_branch
          %183 = sbr.rel (%p181) target = $region16
        $region15: #{basic_block.3} parent=11 // pred_region
          _
        $region16: #{basic_block.3} parent=11 // pred_fallthru
          _
        // Predicated region
        $region17: #{basic_block.3} parent=11 // pred_check
          %p184 = pneg %p96
        $region18: #{basic_block.3} parent=11 // pred_check_branch
          %186 = sbr.rel (%p184) target = $region20
        $region19: #{basic_block.3} parent=11 // pred_region
          _
        $region20: #{basic_block.3} parent=11 // pred_fallthru
          _
        // Predicated region
        $region21: #{basic_block.3} parent=11 // pred_check
          %p187 = pneg %p117
        $region22: #{basic_block.3} parent=11 // pred_check_branch
          %189 = sbr.rel (%p187) target = $region24
        $region23: #{basic_block.3} parent=11 // pred_region
          _
        $region24: #{basic_block.3} parent=11 // pred_fallthru
          _
        // Predicated region
        $region25: #{basic_block.3} parent=11 // pred_check
          %p190 = pneg %p138
        $region26: #{basic_block.3} parent=11 // pred_check_branch
          %192 = sbr.rel (%p190) target = $region28
        $region27: #{basic_block.3} parent=11 // pred_region
          _
        $region28: #{basic_block.3} parent=11 // pred_fallthru
          _
      $region12: #{basic_block.3} parent=5 // pred_fallthru
        _
      %p193 = scmp.lt.s32.totalorder %s14, 2
      // Predicated region
      $region29: #{basic_block.3} parent=5 // pred_check
        %p194 = pneg %p193
      $region30: #{basic_block.3} parent=5 // pred_check_branch
        %196 = sbr.rel (%p194) target = $region32
      $region31: #{basic_block.3} parent=5 // pred_region
        // Predicated region
        $region33: #{basic_block.3} parent=31 // pred_check
          %p197 = pneg %p48
        $region34: #{basic_block.3} parent=31 // pred_check_branch
          %199 = sbr.rel (%p197) target = $region36
        $region35: #{basic_block.3} parent=31 // pred_region
          %p200 = scmp.lt.s32.totalorder %s21, 1
          %s201 = scalar_select %p200, %s21, 1
          %p202 = scmp.lt.s32.totalorder %s22, 0
          %s203 = scalar_select %p202, %s22, 0
          %s204 = sadd.s32 %s203, %s201
          %s205 = smul.addr %s204, 4
          %s206 = scalar_lea.vmem %s0, %s205
        $region36: #{basic_block.3} parent=31 // pred_fallthru
          _
      $region32: #{basic_block.3} parent=5 // pred_fallthru
        _
      %p207 = scmp.le.s32.totalorder 1, %s14
      %p208 = scmp.lt.s32.totalorder %s14, 3
      %p209 = pnand %p207, %p208
      %p210 = pneg %p209
      // Predicated region
      $region37: #{basic_block.3} parent=5 // pred_check
        _
      $region38: #{basic_block.3} parent=5 // pred_check_branch
        %212 = sbr.rel (%p209) target = $region40
      $region39: #{basic_block.3} parent=5 // pred_region
        %s213 = ssub.s32 %s14, 1
        %p214 = scmp.lt.s32.totalorder %s23, 1
        %s215 = scalar_select %p214, %s23, 1
        %p216 = scmp.lt.s32.totalorder %s24, 0
        %s217 = scalar_select %p216, %s24, 0
        %s218 = sadd.s32 %s217, %s215
        %s219 = smul.addr %s218, 4
        %s220 = scalar_lea.vmem %s0, %s219
        %p221 = pneg %p54
        %p222 = pneg %p51
        %p223 = pneg %p75
        %p224 = pneg %p72
        %p225 = pneg %p96
        %p226 = pneg %p93
        %p227 = pneg %p117
        %p228 = pneg %p114
        %p229 = pneg %p138
        %p230 = pneg %p135
        %p231 = pneg %p166
        %p232 = pneg %p163
        %s233 = sand.u32 %s153, 1
        %s234 = scalar_lea.sflag [#allocation3], %s233
        %s235 = sand.u32 %s153, 1
        %s236 = smul.addr %s235, 8
        %s237 = scalar_lea.vmem [#allocation2], %s236
        %p238 = scmp.lt.s32.totalorder %s23, 1
        %s239 = scalar_select %p238, %s23, 1
        %p240 = scmp.lt.s32.totalorder %s24, 0
        %s241 = scalar_select %p240, %s24, 0
        %s242 = sadd.s32 %s241, %s239
        %s243 = smul.addr %s242, 4
        %s244 = scalar_lea.vmem %s0, %s243
        %v245 = vld [vmem:[%s244] sm:$0xf]
        %v246 = vld [vmem:[%s1] sm:$0xff]
        %s247 = scalar_lea.vmem %s1, 8
        %v248 = vld [vmem:[%s247] sm:$0xff]
        %250 = vrot.lane.b32.xlu0 %v245, 127
        %v251 = vpop.permute.xlu0 %250
        %vm252 = vcmask 31744
        %v254 = vsel %vm252, %v248, 0
        %vm256 = vcmask 1043456
        %v257 = vsel %vm256, %v251, 0
        %259 = vmatprep.subr.mxu0 0.0
        %260 = vmatpush1.msra.mxu0 0.0
        %261 = vmatprep.subr.mxu0 0.0
        %262 = vmatpush1.msra.mxu0 0.0
        %263 = vmatprep.subr.mxu0 0.0
        %264 = vmatpush1.msra.mxu0 0.0
        %265 = vmatprep.subr.mxu0 0.0
        %266 = vmatpush1.msra.mxu0 0.0
        %267 = vmatprep.subr.mxu0 0.0
        %268 = vmatpush1.msra.mxu0 0.0
        %269 = vmatprep.subr.mxu0 0.0
        %270 = vmatpush1.msra.mxu0 0.0
        %271 = vmatprep.subr.mxu0 0.0
        %272 = vmatpush1.msra.mxu0 0.0
        %273 = vmatprep.subr.mxu0 0.0
        %274 = vmatpush1.msra.mxu0 0.0
        %275 = vmatprep.subr.mxu0 0.0
        %276 = vmatpush1.msra.mxu0 0.0
        %277 = vmatprep.subr.mxu0 0.0
        %278 = vmatpush1.msra.mxu0 0.0
        %279 = vmatprep.subr.mxu0 0.0
        %280 = vmatpush1.msra.mxu0 0.0
        %281 = vmatprep.subr.mxu0 0.0
        %282 = vmatpush1.msra.mxu0 0.0
        %283 = vmatprep.subr.mxu0 0.0
        %284 = vmatpush1.msra.mxu0 0.0
        %285 = vmatprep.subr.mxu0 0.0
        %286 = vmatpush1.msra.mxu0 0.0
        %287 = vmatprep.subr.mxu0 0.0
        %288 = vmatpush1.msra.mxu0 0.0
        %289 = vmatprep.subr.mxu0 0.0
        %290 = vmatpush1.msra.mxu0 %v257
        %291 = vmatprep.subr.mxu0 0.0
        %292 = vmatpush2.msra.mxu0 0.0
        %293 = vmatprep.subr.mxu0 0.0
        %294 = vmatpush2.msra.mxu0 0.0
        %295 = vmatprep.subr.mxu0 0.0
        %296 = vmatpush2.msra.mxu0 0.0
        %297 = vmatprep.subr.mxu0 0.0
        %298 = vmatpush2.msra.mxu0 0.0
        %299 = vmatprep.subr.mxu0 0.0
        %300 = vmatpush2.msra.mxu0 0.0
        %301 = vmatprep.subr.mxu0 0.0
        %302 = vmatpush2.msra.mxu0 0.0
        %303 = vmatprep.subr.mxu0 0.0
        %304 = vmatpush2.msra.mxu0 0.0
        %305 = vmatprep.subr.mxu0 0.0
        %306 = vmatpush2.msra.mxu0 0.0
        %307 = vmatprep.subr.mxu0 0.0
        %308 = vmatpush2.msra.mxu0 0.0
        %309 = vmatprep.subr.mxu0 0.0
        %310 = vmatpush2.msra.mxu0 0.0
        %311 = vmatprep.subr.mxu0 0.0
        %312 = vmatpush2.msra.mxu0 0.0
        %313 = vmatprep.subr.mxu0 0.0
        %314 = vmatpush2.msra.mxu0 0.0
        %315 = vmatprep.subr.mxu0 0.0
        %316 = vmatpush2.msra.mxu0 0.0
        %317 = vmatprep.subr.mxu0 0.0
        %318 = vmatpush2.msra.mxu0 0.0
        %319 = vmatprep.subr.mxu0 0.0
        %320 = vmatpush2.msra.mxu0 0.0
        %321 = vmatprep.subr.mxu0 0.0
        %322 = vmatpush2.msra.mxu0 0.0
        %323 = vmatprep.mubr.f32.mxu0 0.0
        %324 = vmatmul.mubr.f32.gmra.mxu0 %v254
        %v325 = vpop.f32.mrf.mxu0
        %v326 = vadd.f32 0.0, %v325
        %v327 = vpop.f32.mrf.mxu0
        %328 = vdwg.mxu0
        %v330 = vsel %vm252, %v246, 0
        %v332 = vsel %vm256, %v245, 0
        %334 = vmatprep.subr.mxu0 0.0
        %335 = vmatpush1.msra.mxu0 0.0
        %336 = vmatprep.subr.mxu0 0.0
        %337 = vmatpush1.msra.mxu0 0.0
        %338 = vmatprep.subr.mxu0 0.0
        %339 = vmatpush1.msra.mxu0 0.0
        %340 = vmatprep.subr.mxu0 0.0
        %341 = vmatpush1.msra.mxu0 0.0
        %342 = vmatprep.subr.mxu0 0.0
        %343 = vmatpush1.msra.mxu0 0.0
        %344 = vmatprep.subr.mxu0 0.0
        %345 = vmatpush1.msra.mxu0 0.0
        %346 = vmatprep.subr.mxu0 0.0
        %347 = vmatpush1.msra.mxu0 0.0
        %348 = vmatprep.subr.mxu0 0.0
        %349 = vmatpush1.msra.mxu0 0.0
        %350 = vmatprep.subr.mxu0 0.0
        %351 = vmatpush1.msra.mxu0 0.0
        %352 = vmatprep.subr.mxu0 0.0
        %353 = vmatpush1.msra.mxu0 0.0
        %354 = vmatprep.subr.mxu0 0.0
        %355 = vmatpush1.msra.mxu0 0.0
        %356 = vmatprep.subr.mxu0 0.0
        %357 = vmatpush1.msra.mxu0 0.0
        %358 = vmatprep.subr.mxu0 0.0
        %359 = vmatpush1.msra.mxu0 0.0
        %360 = vmatprep.subr.mxu0 0.0
        %361 = vmatpush1.msra.mxu0 0.0
        %362 = vmatprep.subr.mxu0 0.0
        %363 = vmatpush1.msra.mxu0 0.0
        %364 = vmatprep.subr.mxu0 0.0
        %365 = vmatpush1.msra.mxu0 %v332
        %366 = vmatprep.subr.mxu0 0.0
        %367 = vmatpush2.msra.mxu0 0.0
        %368 = vmatprep.subr.mxu0 0.0
        %369 = vmatpush2.msra.mxu0 0.0
        %370 = vmatprep.subr.mxu0 0.0
        %371 = vmatpush2.msra.mxu0 0.0
        %372 = vmatprep.subr.mxu0 0.0
        %373 = vmatpush2.msra.mxu0 0.0
        %374 = vmatprep.subr.mxu0 0.0
        %375 = vmatpush2.msra.mxu0 0.0
        %376 = vmatprep.subr.mxu0 0.0
        %377 = vmatpush2.msra.mxu0 0.0
        %378 = vmatprep.subr.mxu0 0.0
        %379 = vmatpush2.msra.mxu0 0.0
        %380 = vmatprep.subr.mxu0 0.0
        %381 = vmatpush2.msra.mxu0 0.0
        %382 = vmatprep.subr.mxu0 0.0
        %383 = vmatpush2.msra.mxu0 0.0
        %384 = vmatprep.subr.mxu0 0.0
        %385 = vmatpush2.msra.mxu0 0.0
        %386 = vmatprep.subr.mxu0 0.0
        %387 = vmatpush2.msra.mxu0 0.0
        %388 = vmatprep.subr.mxu0 0.0
        %389 = vmatpush2.msra.mxu0 0.0
        %390 = vmatprep.subr.mxu0 0.0
        %391 = vmatpush2.msra.mxu0 0.0
        %392 = vmatprep.subr.mxu0 0.0
        %393 = vmatpush2.msra.mxu0 0.0
        %394 = vmatprep.subr.mxu0 0.0
        %395 = vmatpush2.msra.mxu0 0.0
        %396 = vmatprep.subr.mxu0 0.0
        %397 = vmatpush2.msra.mxu0 0.0
        %398 = vmatprep.mubr.f32.mxu0 0.0
        %399 = vmatmul.mubr.f32.gmra.mxu0 %v330
        %v400 = vpop.f32.mrf.mxu0
        %v401 = vadd.f32 %v326, %v400
        %v402 = vpop.f32.mrf.mxu0
        %403 = vdwg.mxu0
        %s404 = scalar_lea.vmem %s1, 16
        %v405 = vld [vmem:[%s404] sm:$0xff]
        %406 = vrot.lane.b32.xlu0 %v245, 126
        %v407 = vpop.permute.xlu0 %406
        %v409 = vsel %vm252, %v405, 0
        %v411 = vsel %vm256, %v407, 0
        %413 = vmatprep.subr.mxu0 0.0
        %414 = vmatpush1.msra.mxu0 0.0
        %415 = vmatprep.subr.mxu0 0.0
        %416 = vmatpush1.msra.mxu0 0.0
        %417 = vmatprep.subr.mxu0 0.0
        %418 = vmatpush1.msra.mxu0 0.0
        %419 = vmatprep.subr.mxu0 0.0
        %420 = vmatpush1.msra.mxu0 0.0
        %421 = vmatprep.subr.mxu0 0.0
        %422 = vmatpush1.msra.mxu0 0.0
        %423 = vmatprep.subr.mxu0 0.0
        %424 = vmatpush1.msra.mxu0 0.0
        %425 = vmatprep.subr.mxu0 0.0
        %426 = vmatpush1.msra.mxu0 0.0
        %427 = vmatprep.subr.mxu0 0.0
        %428 = vmatpush1.msra.mxu0 0.0
        %429 = vmatprep.subr.mxu0 0.0
        %430 = vmatpush1.msra.mxu0 0.0
        %431 = vmatprep.subr.mxu0 0.0
        %432 = vmatpush1.msra.mxu0 0.0
        %433 = vmatprep.subr.mxu0 0.0
        %434 = vmatpush1.msra.mxu0 0.0
        %435 = vmatprep.subr.mxu0 0.0
        %436 = vmatpush1.msra.mxu0 0.0
        %437 = vmatprep.subr.mxu0 0.0
        %438 = vmatpush1.msra.mxu0 0.0
        %439 = vmatprep.subr.mxu0 0.0
        %440 = vmatpush1.msra.mxu0 0.0
        %441 = vmatprep.subr.mxu0 0.0
        %442 = vmatpush1.msra.mxu0 0.0
        %443 = vmatprep.subr.mxu0 0.0
        %444 = vmatpush1.msra.mxu0 %v411
        %445 = vmatprep.subr.mxu0 0.0
        %446 = vmatpush2.msra.mxu0 0.0
        %447 = vmatprep.subr.mxu0 0.0
        %448 = vmatpush2.msra.mxu0 0.0
        %449 = vmatprep.subr.mxu0 0.0
        %450 = vmatpush2.msra.mxu0 0.0
        %451 = vmatprep.subr.mxu0 0.0
        %452 = vmatpush2.msra.mxu0 0.0
        %453 = vmatprep.subr.mxu0 0.0
        %454 = vmatpush2.msra.mxu0 0.0
        %455 = vmatprep.subr.mxu0 0.0
        %456 = vmatpush2.msra.mxu0 0.0
        %457 = vmatprep.subr.mxu0 0.0
        %458 = vmatpush2.msra.mxu0 0.0
        %459 = vmatprep.subr.mxu0 0.0
        %460 = vmatpush2.msra.mxu0 0.0
        %461 = vmatprep.subr.mxu0 0.0
        %462 = vmatpush2.msra.mxu0 0.0
        %463 = vmatprep.subr.mxu0 0.0
        %464 = vmatpush2.msra.mxu0 0.0
        %465 = vmatprep.subr.mxu0 0.0
        %466 = vmatpush2.msra.mxu0 0.0
        %467 = vmatprep.subr.mxu0 0.0
        %468 = vmatpush2.msra.mxu0 0.0
        %469 = vmatprep.subr.mxu0 0.0
        %470 = vmatpush2.msra.mxu0 0.0
        %471 = vmatprep.subr.mxu0 0.0
        %472 = vmatpush2.msra.mxu0 0.0
        %473 = vmatprep.subr.mxu0 0.0
        %474 = vmatpush2.msra.mxu0 0.0
        %475 = vmatprep.subr.mxu0 0.0
        %476 = vmatpush2.msra.mxu0 0.0
        %477 = vmatprep.mubr.f32.mxu0 0.0
        %478 = vmatmul.mubr.f32.gmra.mxu0 %v409
        %v479 = vpop.f32.mrf.mxu0
        %v480 = vadd.f32 0.0, %v479
        %v481 = vpop.f32.mrf.mxu0
        %482 = vdwg.mxu0
        %v483 = vadd.f32 %v401, %v480
        %v484 = vld [vmem:[%s2] sm:$0xff]
        %486 = vset.pattern.permute.xlu0 0
        %487 = vperm.xlu0 %486, %v484
        %v488 = vpop.permute.xlu0 %487
        %v490 = vadd.f32 %v483, %v488
        %v491 = vmul.f32 %v490, 0.5
        %v492 = vmul.f32 %v490, 0.70710677
        %v493 = verf.f32.pop %v492
        %v494 = vadd.f32 %v493, 1.0
        %v495 = vmul.f32 %v491, %v494
        %v496 = vld [vmem:[%s3] sm:$0xff]
        %498 = vset.pattern.permute.xlu0 0
        %499 = vperm.xlu0 %498, %v496
        %v500 = vpop.permute.xlu0 %499
        %v502 = vmul.f32 %v495, %v500
        %v503 = vld [vmem:[%s4] sm:$0xff]
        %505 = vset.pattern.permute.xlu0 0
        %506 = vperm.xlu0 %505, %v503
        %v507 = vpop.permute.xlu0 %506
        %v509 = vadd.f32 %v502, %v507
        %vm510 = vcmask 130048
        %511 = vst.msk [vmem:[%s237] sm:$0xff] %vm510, %v509
        %s512 = sand.u32 %s153, 1
        %s513 = scalar_lea.sflag [#allocation3], %s512
        %s514 = sand.u32 %s153, 1
        %s515 = smul.addr %s514, 8
        %s516 = scalar_lea.vmem [#allocation2], %s515
        // Predicated region
        $region41: #{basic_block.3} parent=39 // pred_check
          %p517 = pneg %p163
        $region42: #{basic_block.3} parent=39 // pred_check_branch
          %519 = sbr.rel (%p517) target = $region44
        $region43: #{basic_block.3} parent=39 // pred_region
          %s521 = ssub.s32 128, 128
          %522 = vsyncadd %s513, %s521
          %s523 = sadd.s32 %s24, %s23
          %s524 = smul.addr %s523, 128
          %s525 = scalar_lea.hbm %s5, %s524
          %s527 = sshll.u32 %s516, 4
          %s528 = int_to_ptr.vmem [resolvable:$true] %s527
          %530 = dma.vmem_to_hbm [thread:$0]  %s528, 128, %s525, %s513
        $region44: #{basic_block.3} parent=39 // pred_fallthru
          _
      $region40: #{basic_block.3} parent=5 // pred_fallthru
        _
      %p531 = scmp.le.s32.totalorder 2, %s14
      // Predicated region
      $region45: #{basic_block.3} parent=5 // pred_check
        %p532 = pneg %p531
      $region46: #{basic_block.3} parent=5 // pred_check_branch
        %534 = sbr.rel (%p532) target = $region48
      $region47: #{basic_block.3} parent=5 // pred_region
        %s535 = ssub.s32 %s14, 2
        // Predicated region
        $region49: #{basic_block.3} parent=47 // pred_check
          %p536 = pneg %p169
        $region50: #{basic_block.3} parent=47 // pred_check_branch
          %538 = sbr.rel (%p536) target = $region52
        $region51: #{basic_block.3} parent=47 // pred_region
          %s539 = sand.u32 %s154, 1
          %s540 = scalar_lea.sflag [#allocation3], %s539
          %s541 = sand.u32 %s154, 1
          %s542 = smul.addr %s541, 8
          %s543 = scalar_lea.vmem [#allocation2], %s542
          %544 = dma.done %s540, 128
        $region52: #{basic_block.3} parent=47 // pred_fallthru
          _
      $region48: #{basic_block.3} parent=5 // pred_fallthru
        _
    $region6: #{basic_block.3} parent=1 // loop_footer
      %s18 = sadd.s32 1, %s14
    $region7: #{basic_block.3} parent=1 // loop_footer_branch
      %13 = sbr.rel target = $region3
    $region8: #{basic_block.3} parent=1 // loop_exit
      _
    %545 = vsyncpa [#allocation3], 1
    %s546 = scalar_lea.sflag [#allocation3], 1
    %547 = vsyncpa %s546, 1

// kernel: basic_block.2
$region0: #{basic_block.2}
  #allocation0 [shape = 'u32[]', space=smem, size = 0x4, offset = 0x4, fixed_abs, tag = 'smem constant byte address 0x4 - core index']
  #allocation1 [shape = 'u32[144,128]{1,0:T(1,128)}', space=vmem, size = 0x12000, scoped, tag = 'internal scratch']
  %s0 = inlined_call_operand.vmem [shape: f32[2,1,4,18], index: 0, kind: input, shape index: {}]
  %s1 = inlined_call_operand.vmem [shape: f32[3,8,4], index: 1, kind: input, shape index: {}]
  %s2 = inlined_call_operand.vmem [shape: f32[8,1], index: 2, kind: input, shape index: {}]
  %s3 = inlined_call_operand.vmem [shape: f32[2,8,16], index: 3, kind: output, shape index: {0}]
  %s4 = inlined_call_operand.vmem [shape: f32[2,8,16], index: 4, kind: output, shape index: {1}]
  %5 = xla_tuple %s3, %s4
  %s6 = sld [smem:[#allocation0]]
  $region57: #{basic_block.2} parent=0
    _
  %s8 = ssub.s32 1, %s6
  %s9 = scalar_select 0, %s8, %s6
  loop: start=0, step=1, limit=4
  $region2: #{basic_block.2} parent=0 // loop_pre_header
    _
  $region3: #{basic_block.2} parent=0 // loop_header
    %s11 = sphi 0, %s15
    %p12 = scmp.ge.s32.totalorder %s11, 4
    %s18 = sphi 0, %s30
    %s19 = sphi 0, %s26
    %s20 = sphi 0, %s18
    %s21 = sphi 0, %s19
    %s22 = sphi 0, %s20
    %s23 = sphi 0, %s21
    %s35 = sphi 0, %s37
    %s38 = sphi 0, %s35
    %s39 = sphi 0, %s38
    %s55 = sphi 0, %s39
    %s59 = sphi 0, %s59
    %s61 = sphi 0, %s59
    %s62 = sphi 0, %s61
    %s76 = sphi 0, %s62
    %s80 = sphi 0, %s80
    %s82 = sphi 0, %s80
    %s83 = sphi 0, %s82
    %s97 = sphi 0, %s83
    %s103 = sphi 0, %s105
    %s106 = sphi 0, %s103
    %s107 = sphi 0, %s106
    %s123 = sphi 0, %s107
    %s129 = sphi 0, %s131
    %s132 = sphi 0, %s129
    %s133 = sphi 0, %s132
    %s149 = sphi 0, %s133
  $region4: #{basic_block.2} parent=0 // loop_header_branch
    %14 = sbr.rel (%p12) target = $region8
  $region5: #{basic_block.2} parent=0 // loop_body
    %s16 = ssub.s32 %s11, 1
    %s17 = ssub.s32 %s11, 2
    %s24 = sadd.s32 1, %s19
    %p25 = scmp.ge.s32.totalorder %s24, 1
    %s26 = scalar_select %p25, 0, %s24
    %s27 = sadd.s32 1, %s18
    %s28 = scalar_select %p25, %s27, %s18
    %p29 = scmp.ge.s32.totalorder %s28, 2
    %s30 = scalar_select %p29, 0, %s28
    %s31 = ssub.s32 %s18, %s30
    %s32 = ssub.s32 %s19, %s26
    %s33 = sor.u32 %s31, %s32
    %p34 = scmp.eq.s32.totalorder %s33, 0
    %s36 = sadd.s32 %s35, 1
    %s37 = scalar_select %p34, %s35, %s36
    %p40 = pneg %p34
    %p41 = scmp.eq.s32.totalorder %s11, 1
    %p42 = por %p40, %p41
    %p43 = scmp.ne.s32.totalorder %s35, %s38
    %p44 = scmp.eq.s32.totalorder %s11, 0
    %p45 = por %p43, %p44
    %p46 = scmp.ne.s32.totalorder %s35, %s38
    %p47 = scmp.eq.s32.totalorder %s16, 1
    %p48 = por %p46, %p47
    %p49 = scmp.ne.s32.totalorder %s38, %s39
    %p50 = scmp.eq.s32.totalorder %s16, 0
    %p51 = por %p49, %p50
    %p52 = scmp.ne.s32.totalorder %s38, %s39
    %p53 = scmp.eq.s32.totalorder %s17, 1
    %p54 = por %p52, %p53
    %p56 = scmp.ne.s32.totalorder %s39, %s55
    %p57 = scmp.eq.s32.totalorder %s17, 0
    %p58 = por %p56, %p57
    %s60 = sadd.s32 %s59, 1
    %p63 = scmp.eq.s32.totalorder %s11, 1
    %p64 = scmp.ne.s32.totalorder %s59, %s61
    %p65 = scmp.eq.s32.totalorder %s11, 0
    %p66 = por %p64, %p65
    %p67 = scmp.ne.s32.totalorder %s59, %s61
    %p68 = scmp.eq.s32.totalorder %s16, 1
    %p69 = por %p67, %p68
    %p70 = scmp.ne.s32.totalorder %s61, %s62
    %p71 = scmp.eq.s32.totalorder %s16, 0
    %p72 = por %p70, %p71
    %p73 = scmp.ne.s32.totalorder %s61, %s62
    %p74 = scmp.eq.s32.totalorder %s17, 1
    %p75 = por %p73, %p74
    %p77 = scmp.ne.s32.totalorder %s62, %s76
    %p78 = scmp.eq.s32.totalorder %s17, 0
    %p79 = por %p77, %p78
    %s81 = sadd.s32 %s80, 1
    %p84 = scmp.eq.s32.totalorder %s11, 1
    %p85 = scmp.ne.s32.totalorder %s80, %s82
    %p86 = scmp.eq.s32.totalorder %s11, 0
    %p87 = por %p85, %p86
    %p88 = scmp.ne.s32.totalorder %s80, %s82
    %p89 = scmp.eq.s32.totalorder %s16, 1
    %p90 = por %p88, %p89
    %p91 = scmp.ne.s32.totalorder %s82, %s83
    %p92 = scmp.eq.s32.totalorder %s16, 0
    %p93 = por %p91, %p92
    %p94 = scmp.ne.s32.totalorder %s82, %s83
    %p95 = scmp.eq.s32.totalorder %s17, 1
    %p96 = por %p94, %p95
    %p98 = scmp.ne.s32.totalorder %s83, %s97
    %p99 = scmp.eq.s32.totalorder %s17, 0
    %p100 = por %p98, %p99
    %s101 = ssub.s32 %s18, %s30
    %p102 = scmp.eq.s32.totalorder %s101, 0
    %s104 = sadd.s32 %s103, 1
    %s105 = scalar_select %p102, %s103, %s104
    %p108 = pneg %p102
    %p109 = scmp.eq.s32.totalorder %s11, 1
    %p110 = por %p108, %p109
    %p111 = scmp.ne.s32.totalorder %s103, %s106
    %p112 = scmp.eq.s32.totalorder %s11, 0
    %p113 = por %p111, %p112
    %p114 = scmp.ne.s32.totalorder %s103, %s106
    %p115 = scmp.eq.s32.totalorder %s16, 1
    %p116 = por %p114, %p115
    %p117 = scmp.ne.s32.totalorder %s106, %s107
    %p118 = scmp.eq.s32.totalorder %s16, 0
    %p119 = por %p117, %p118
    %p120 = scmp.ne.s32.totalorder %s106, %s107
    %p121 = scmp.eq.s32.totalorder %s17, 1
    %p122 = por %p120, %p121
    %p124 = scmp.ne.s32.totalorder %s107, %s123
    %p125 = scmp.eq.s32.totalorder %s17, 0
    %p126 = por %p124, %p125
    %s127 = ssub.s32 %s18, %s30
    %p128 = scmp.eq.s32.totalorder %s127, 0
    %s130 = sadd.s32 %s129, 1
    %s131 = scalar_select %p128, %s129, %s130
    %p134 = pneg %p128
    %p135 = scmp.eq.s32.totalorder %s11, 1
    %p136 = por %p134, %p135
    %p137 = scmp.ne.s32.totalorder %s129, %s132
    %p138 = scmp.eq.s32.totalorder %s11, 0
    %p139 = por %p137, %p138
    %p140 = scmp.ne.s32.totalorder %s129, %s132
    %p141 = scmp.eq.s32.totalorder %s16, 1
    %p142 = por %p140, %p141
    %p143 = scmp.ne.s32.totalorder %s132, %s133
    %p144 = scmp.eq.s32.totalorder %s16, 0
    %p145 = por %p143, %p144
    %p146 = scmp.ne.s32.totalorder %s132, %s133
    %p147 = scmp.eq.s32.totalorder %s17, 1
    %p148 = por %p146, %p147
    %p150 = scmp.ne.s32.totalorder %s133, %s149
    %p151 = scmp.eq.s32.totalorder %s17, 0
    %p152 = por %p150, %p151
    %p153 = scmp.le.s32.totalorder 1, %s11
    %p154 = scmp.lt.s32.totalorder %s11, 3
    %p155 = pnand %p153, %p154
    %p156 = pneg %p155
    // Predicated region
    $region9: #{basic_block.2} parent=5 // pred_check
      _
    $region10: #{basic_block.2} parent=5 // pred_check_branch
      %158 = sbr.rel (%p155) target = $region12
    $region11: #{basic_block.2} parent=5 // pred_region
      %s159 = ssub.s32 %s11, 1
      // Predicated region
      $region13: #{basic_block.2} parent=11 // pred_check
        %p160 = pneg %p72
      $region14: #{basic_block.2} parent=11 // pred_check_branch
        %162 = sbr.rel (%p160) target = $region16
      $region15: #{basic_block.2} parent=11 // pred_region
        _
      $region16: #{basic_block.2} parent=11 // pred_fallthru
        _
      // Predicated region
      $region17: #{basic_block.2} parent=11 // pred_check
        %p163 = pneg %p93
      $region18: #{basic_block.2} parent=11 // pred_check_branch
        %165 = sbr.rel (%p163) target = $region20
      $region19: #{basic_block.2} parent=11 // pred_region
        _
      $region20: #{basic_block.2} parent=11 // pred_fallthru
        _
    $region12: #{basic_block.2} parent=5 // pred_fallthru
      _
    %p166 = scmp.lt.s32.totalorder %s11, 2
    // Predicated region
    $region21: #{basic_block.2} parent=5 // pred_check
      %p167 = pneg %p166
    $region22: #{basic_block.2} parent=5 // pred_check_branch
      %169 = sbr.rel (%p167) target = $region24
    $region23: #{basic_block.2} parent=5 // pred_region
      // Predicated region
      $region25: #{basic_block.2} parent=23 // pred_check
        %p170 = pneg %p45
      $region26: #{basic_block.2} parent=23 // pred_check_branch
        %172 = sbr.rel (%p170) target = $region28
      $region27: #{basic_block.2} parent=23 // pred_region
        %p173 = scmp.lt.s32.totalorder %s18, 1
        %s174 = scalar_select %p173, %s18, 1
        %p175 = scmp.lt.s32.totalorder %s19, 0
        %s176 = scalar_select %p175, %s19, 0
        %s177 = sadd.s32 %s176, %s174
        %s178 = smul.addr %s177, 4
        %s179 = scalar_lea.vmem %s0, %s178
      $region28: #{basic_block.2} parent=23 // pred_fallthru
        _
    $region24: #{basic_block.2} parent=5 // pred_fallthru
      _
    %p180 = scmp.le.s32.totalorder 1, %s11
    %p181 = scmp.lt.s32.totalorder %s11, 3
    %p182 = pnand %p180, %p181
    %p183 = pneg %p182
    // Predicated region
    $region29: #{basic_block.2} parent=5 // pred_check
      _
    $region30: #{basic_block.2} parent=5 // pred_check_branch
      %185 = sbr.rel (%p182) target = $region32
    $region31: #{basic_block.2} parent=5 // pred_region
      %s186 = ssub.s32 %s11, 1
      %p187 = scmp.lt.s32.totalorder %s20, 1
      %s188 = scalar_select %p187, %s20, 1
      %p189 = scmp.lt.s32.totalorder %s21, 0
      %s190 = scalar_select %p189, %s21, 0
      %s191 = sadd.s32 %s190, %s188
      %s192 = smul.addr %s191, 4
      %s193 = scalar_lea.vmem %s0, %s192
      %p194 = pneg %p51
      %p195 = pneg %p48
      %p196 = pneg %p72
      %p197 = pneg %p69
      %p198 = pneg %p93
      %p199 = pneg %p90
      %p200 = pneg %p119
      %p201 = pneg %p116
      %p202 = scmp.lt.s32.totalorder %s20, 1
      %s203 = scalar_select %p202, %s20, 1
      %s204 = smul.addr %s203, 8
      %s205 = scalar_lea.vmem %s3, %s204
      %p206 = pneg %p145
      %p207 = pneg %p142
      %p208 = scmp.lt.s32.totalorder %s20, 1
      %s209 = scalar_select %p208, %s20, 1
      %s210 = smul.addr %s209, 8
      %s211 = scalar_lea.vmem %s4, %s210
      %p212 = scmp.lt.s32.totalorder %s20, 1
      %s213 = scalar_select %p212, %s20, 1
      %p214 = scmp.lt.s32.totalorder %s21, 0
      %s215 = scalar_select %p214, %s21, 0
      %s216 = sadd.s32 %s215, %s213
      %s217 = smul.addr %s216, 4
      %s218 = scalar_lea.vmem %s0, %s217
      %p219 = scmp.lt.s32.totalorder %s20, 1
      %s220 = scalar_select %p219, %s20, 1
      %s221 = smul.addr %s220, 8
      %s222 = scalar_lea.vmem %s3, %s221
      %p223 = scmp.lt.s32.totalorder %s20, 1
      %s224 = scalar_select %p223, %s20, 1
      %s225 = smul.addr %s224, 8
      %s226 = scalar_lea.vmem %s4, %s225
      %p227 = scmp.eq.s32.totalorder %s21, 0
      // Predicated region
      $region33: #{basic_block.2} parent=31 // pred_check
        %p228 = pneg %p227
      $region34: #{basic_block.2} parent=31 // pred_check_branch
        %230 = sbr.rel (%p228) target = $region36
      $region35: #{basic_block.2} parent=31 // pred_region
        %vm231 = vcmask 130048
        %232 = vst.msk [vmem:[%s222] sm:$0xff] %vm231, 0.0
        %233 = vst.msk [vmem:[%s226] sm:$0xff] %vm231, 0.0
      $region36: #{basic_block.2} parent=31 // pred_fallthru
        _
      %v234 = vld [vmem:[%s218] sm:$0xf]
      %v235 = vld [vmem:[%s1] sm:$0xff]
      %s236 = scalar_lea.vmem %s1, 8
      %v237 = vld [vmem:[%s236] sm:$0xff]
      %239 = vrot.lane.b32.xlu0 %v234, 127
      %v240 = vpop.permute.xlu0 %239
      %vm241 = vcmask 31744
      %v243 = vsel %vm241, %v237, 0
      %vm245 = vcmask 1043456
      %v246 = vsel %vm245, %v240, 0
      %248 = vmatprep.subr.mxu0 0.0
      %249 = vmatpush1.msra.mxu0 0.0
      %250 = vmatprep.subr.mxu0 0.0
      %251 = vmatpush1.msra.mxu0 0.0
      %252 = vmatprep.subr.mxu0 0.0
      %253 = vmatpush1.msra.mxu0 0.0
      %254 = vmatprep.subr.mxu0 0.0
      %255 = vmatpush1.msra.mxu0 0.0
      %256 = vmatprep.subr.mxu0 0.0
      %257 = vmatpush1.msra.mxu0 0.0
      %258 = vmatprep.subr.mxu0 0.0
      %259 = vmatpush1.msra.mxu0 0.0
      %260 = vmatprep.subr.mxu0 0.0
      %261 = vmatpush1.msra.mxu0 0.0
      %262 = vmatprep.subr.mxu0 0.0
      %263 = vmatpush1.msra.mxu0 0.0
      %264 = vmatprep.subr.mxu0 0.0
      %265 = vmatpush1.msra.mxu0 0.0
      %266 = vmatprep.subr.mxu0 0.0
      %267 = vmatpush1.msra.mxu0 0.0
      %268 = vmatprep.subr.mxu0 0.0
      %269 = vmatpush1.msra.mxu0 0.0
      %270 = vmatprep.subr.mxu0 0.0
      %271 = vmatpush1.msra.mxu0 0.0
      %272 = vmatprep.subr.mxu0 0.0
      %273 = vmatpush1.msra.mxu0 0.0
      %274 = vmatprep.subr.mxu0 0.0
      %275 = vmatpush1.msra.mxu0 0.0
      %276 = vmatprep.subr.mxu0 0.0
      %277 = vmatpush1.msra.mxu0 0.0
      %278 = vmatprep.subr.mxu0 0.0
      %279 = vmatpush1.msra.mxu0 %v246
      %280 = vmatprep.subr.mxu0 0.0
      %281 = vmatpush2.msra.mxu0 0.0
      %282 = vmatprep.subr.mxu0 0.0
      %283 = vmatpush2.msra.mxu0 0.0
      %284 = vmatprep.subr.mxu0 0.0
      %285 = vmatpush2.msra.mxu0 0.0
      %286 = vmatprep.subr.mxu0 0.0
      %287 = vmatpush2.msra.mxu0 0.0
      %288 = vmatprep.subr.mxu0 0.0
      %289 = vmatpush2.msra.mxu0 0.0
      %290 = vmatprep.subr.mxu0 0.0
      %291 = vmatpush2.msra.mxu0 0.0
      %292 = vmatprep.subr.mxu0 0.0
      %293 = vmatpush2.msra.mxu0 0.0
      %294 = vmatprep.subr.mxu0 0.0
      %295 = vmatpush2.msra.mxu0 0.0
      %296 = vmatprep.subr.mxu0 0.0
      %297 = vmatpush2.msra.mxu0 0.0
      %298 = vmatprep.subr.mxu0 0.0
      %299 = vmatpush2.msra.mxu0 0.0
      %300 = vmatprep.subr.mxu0 0.0
      %301 = vmatpush2.msra.mxu0 0.0
      %302 = vmatprep.subr.mxu0 0.0
      %303 = vmatpush2.msra.mxu0 0.0
      %304 = vmatprep.subr.mxu0 0.0
      %305 = vmatpush2.msra.mxu0 0.0
      %306 = vmatprep.subr.mxu0 0.0
      %307 = vmatpush2.msra.mxu0 0.0
      %308 = vmatprep.subr.mxu0 0.0
      %309 = vmatpush2.msra.mxu0 0.0
      %310 = vmatprep.subr.mxu0 0.0
      %311 = vmatpush2.msra.mxu0 0.0
      %312 = vmatprep.mubr.f32.mxu0 0.0
      %313 = vmatmul.mubr.f32.gmra.mxu0 %v243
      %v314 = vpop.f32.mrf.mxu0
      %v315 = vadd.f32 0.0, %v314
      %v316 = vpop.f32.mrf.mxu0
      %317 = vdwg.mxu0
      %v319 = vsel %vm241, %v235, 0
      %v321 = vsel %vm245, %v234, 0
      %323 = vmatprep.subr.mxu0 0.0
      %324 = vmatpush1.msra.mxu0 0.0
      %325 = vmatprep.subr.mxu0 0.0
      %326 = vmatpush1.msra.mxu0 0.0
      %327 = vmatprep.subr.mxu0 0.0
      %328 = vmatpush1.msra.mxu0 0.0
      %329 = vmatprep.subr.mxu0 0.0
      %330 = vmatpush1.msra.mxu0 0.0
      %331 = vmatprep.subr.mxu0 0.0
      %332 = vmatpush1.msra.mxu0 0.0
      %333 = vmatprep.subr.mxu0 0.0
      %334 = vmatpush1.msra.mxu0 0.0
      %335 = vmatprep.subr.mxu0 0.0
      %336 = vmatpush1.msra.mxu0 0.0
      %337 = vmatprep.subr.mxu0 0.0
      %338 = vmatpush1.msra.mxu0 0.0
      %339 = vmatprep.subr.mxu0 0.0
      %340 = vmatpush1.msra.mxu0 0.0
      %341 = vmatprep.subr.mxu0 0.0
      %342 = vmatpush1.msra.mxu0 0.0
      %343 = vmatprep.subr.mxu0 0.0
      %344 = vmatpush1.msra.mxu0 0.0
      %345 = vmatprep.subr.mxu0 0.0
      %346 = vmatpush1.msra.mxu0 0.0
      %347 = vmatprep.subr.mxu0 0.0
      %348 = vmatpush1.msra.mxu0 0.0
      %349 = vmatprep.subr.mxu0 0.0
      %350 = vmatpush1.msra.mxu0 0.0
      %351 = vmatprep.subr.mxu0 0.0
      %352 = vmatpush1.msra.mxu0 0.0
      %353 = vmatprep.subr.mxu0 0.0
      %354 = vmatpush1.msra.mxu0 %v321
      %355 = vmatprep.subr.mxu0 0.0
      %356 = vmatpush2.msra.mxu0 0.0
      %357 = vmatprep.subr.mxu0 0.0
      %358 = vmatpush2.msra.mxu0 0.0
      %359 = vmatprep.subr.mxu0 0.0
      %360 = vmatpush2.msra.mxu0 0.0
      %361 = vmatprep.subr.mxu0 0.0
      %362 = vmatpush2.msra.mxu0 0.0
      %363 = vmatprep.subr.mxu0 0.0
      %364 = vmatpush2.msra.mxu0 0.0
      %365 = vmatprep.subr.mxu0 0.0
      %366 = vmatpush2.msra.mxu0 0.0
      %367 = vmatprep.subr.mxu0 0.0
      %368 = vmatpush2.msra.mxu0 0.0
      %369 = vmatprep.subr.mxu0 0.0
      %370 = vmatpush2.msra.mxu0 0.0
      %371 = vmatprep.subr.mxu0 0.0
      %372 = vmatpush2.msra.mxu0 0.0
      %373 = vmatprep.subr.mxu0 0.0
      %374 = vmatpush2.msra.mxu0 0.0
      %375 = vmatprep.subr.mxu0 0.0
      %376 = vmatpush2.msra.mxu0 0.0
      %377 = vmatprep.subr.mxu0 0.0
      %378 = vmatpush2.msra.mxu0 0.0
      %379 = vmatprep.subr.mxu0 0.0
      %380 = vmatpush2.msra.mxu0 0.0
      %381 = vmatprep.subr.mxu0 0.0
      %382 = vmatpush2.msra.mxu0 0.0
      %383 = vmatprep.subr.mxu0 0.0
      %384 = vmatpush2.msra.mxu0 0.0
      %385 = vmatprep.subr.mxu0 0.0
      %386 = vmatpush2.msra.mxu0 0.0
      %387 = vmatprep.mubr.f32.mxu0 0.0
      %388 = vmatmul.mubr.f32.gmra.mxu0 %v319
      %v389 = vpop.f32.mrf.mxu0
      %v390 = vadd.f32 %v315, %v389
      %v391 = vpop.f32.mrf.mxu0
      %392 = vdwg.mxu0
      %s393 = scalar_lea.vmem %s1, 16
      %v394 = vld [vmem:[%s393] sm:$0xff]
      %395 = vrot.lane.b32.xlu0 %v234, 126
      %v396 = vpop.permute.xlu0 %395
      %v398 = vsel %vm241, %v394, 0
      %v400 = vsel %vm245, %v396, 0
      %402 = vmatprep.subr.mxu0 0.0
      %403 = vmatpush1.msra.mxu0 0.0
      %404 = vmatprep.subr.mxu0 0.0
      %405 = vmatpush1.msra.mxu0 0.0
      %406 = vmatprep.subr.mxu0 0.0
      %407 = vmatpush1.msra.mxu0 0.0
      %408 = vmatprep.subr.mxu0 0.0
      %409 = vmatpush1.msra.mxu0 0.0
      %410 = vmatprep.subr.mxu0 0.0
      %411 = vmatpush1.msra.mxu0 0.0
      %412 = vmatprep.subr.mxu0 0.0
      %413 = vmatpush1.msra.mxu0 0.0
      %414 = vmatprep.subr.mxu0 0.0
      %415 = vmatpush1.msra.mxu0 0.0
      %416 = vmatprep.subr.mxu0 0.0
      %417 = vmatpush1.msra.mxu0 0.0
      %418 = vmatprep.subr.mxu0 0.0
      %419 = vmatpush1.msra.mxu0 0.0
      %420 = vmatprep.subr.mxu0 0.0
      %421 = vmatpush1.msra.mxu0 0.0
      %422 = vmatprep.subr.mxu0 0.0
      %423 = vmatpush1.msra.mxu0 0.0
      %424 = vmatprep.subr.mxu0 0.0
      %425 = vmatpush1.msra.mxu0 0.0
      %426 = vmatprep.subr.mxu0 0.0
      %427 = vmatpush1.msra.mxu0 0.0
      %428 = vmatprep.subr.mxu0 0.0
      %429 = vmatpush1.msra.mxu0 0.0
      %430 = vmatprep.subr.mxu0 0.0
      %431 = vmatpush1.msra.mxu0 0.0
      %432 = vmatprep.subr.mxu0 0.0
      %433 = vmatpush1.msra.mxu0 %v400
      %434 = vmatprep.subr.mxu0 0.0
      %435 = vmatpush2.msra.mxu0 0.0
      %436 = vmatprep.subr.mxu0 0.0
      %437 = vmatpush2.msra.mxu0 0.0
      %438 = vmatprep.subr.mxu0 0.0
      %439 = vmatpush2.msra.mxu0 0.0
      %440 = vmatprep.subr.mxu0 0.0
      %441 = vmatpush2.msra.mxu0 0.0
      %442 = vmatprep.subr.mxu0 0.0
      %443 = vmatpush2.msra.mxu0 0.0
      %444 = vmatprep.subr.mxu0 0.0
      %445 = vmatpush2.msra.mxu0 0.0
      %446 = vmatprep.subr.mxu0 0.0
      %447 = vmatpush2.msra.mxu0 0.0
      %448 = vmatprep.subr.mxu0 0.0
      %449 = vmatpush2.msra.mxu0 0.0
      %450 = vmatprep.subr.mxu0 0.0
      %451 = vmatpush2.msra.mxu0 0.0
      %452 = vmatprep.subr.mxu0 0.0
      %453 = vmatpush2.msra.mxu0 0.0
      %454 = vmatprep.subr.mxu0 0.0
      %455 = vmatpush2.msra.mxu0 0.0
      %456 = vmatprep.subr.mxu0 0.0
      %457 = vmatpush2.msra.mxu0 0.0
      %458 = vmatprep.subr.mxu0 0.0
      %459 = vmatpush2.msra.mxu0 0.0
      %460 = vmatprep.subr.mxu0 0.0
      %461 = vmatpush2.msra.mxu0 0.0
      %462 = vmatprep.subr.mxu0 0.0
      %463 = vmatpush2.msra.mxu0 0.0
      %464 = vmatprep.subr.mxu0 0.0
      %465 = vmatpush2.msra.mxu0 0.0
      %466 = vmatprep.mubr.f32.mxu0 0.0
      %467 = vmatmul.mubr.f32.gmra.mxu0 %v398
      %v468 = vpop.f32.mrf.mxu0
      %v469 = vadd.f32 0.0, %v468
      %v470 = vpop.f32.mrf.mxu0
      %471 = vdwg.mxu0
      %v472 = vadd.f32 %v390, %v469
      %v473 = vld [vmem:[%s2] sm:$0xff]
      %475 = vset.pattern.permute.xlu0 0
      %476 = vperm.xlu0 %475, %v473
      %v477 = vpop.permute.xlu0 %476
      %v479 = vadd.f32 %v472, %v477
      %v480 = vmul.f32 %v479, 0.5
      %v481 = vmul.f32 %v479, 0.70710677
      %v482 = verf.f32.pop %v481
      %v483 = vadd.f32 %v482, 1.0
      %v484 = vmul.f32 %v480, %v483
      %v485 = vmul.f32 %v484, %v484
      %v486 = vld [vmem:[%s222] sm:$0xff]
      %v487 = vadd.f32 %v486, %v484
      %vm488 = vcmask 130048
      %489 = vst.msk [vmem:[%s222] sm:$0xff] %vm488, %v487
      %v490 = vld [vmem:[%s226] sm:$0xff]
      %v491 = vadd.f32 %v490, %v485
      %492 = vst.msk [vmem:[%s226] sm:$0xff] %vm488, %v491
      %p493 = scmp.lt.s32.totalorder %s20, 1
      %s494 = scalar_select %p493, %s20, 1
      %s495 = smul.addr %s494, 8
      %s496 = scalar_lea.vmem %s3, %s495
      %p497 = scmp.lt.s32.totalorder %s20, 1
      %s498 = scalar_select %p497, %s20, 1
      %s499 = smul.addr %s498, 8
      %s500 = scalar_lea.vmem %s4, %s499
      // Predicated region
      $region37: #{basic_block.2} parent=31 // pred_check
        %p501 = pneg %p116
      $region38: #{basic_block.2} parent=31 // pred_check_branch
        %503 = sbr.rel (%p501) target = $region40
      $region39: #{basic_block.2} parent=31 // pred_region
        _
      $region40: #{basic_block.2} parent=31 // pred_fallthru
        _
      // Predicated region
      $region41: #{basic_block.2} parent=31 // pred_check
        %p504 = pneg %p142
      $region42: #{basic_block.2} parent=31 // pred_check_branch
        %506 = sbr.rel (%p504) target = $region44
      $region43: #{basic_block.2} parent=31 // pred_region
        _
      $region44: #{basic_block.2} parent=31 // pred_fallthru
        _
    $region32: #{basic_block.2} parent=5 // pred_fallthru
      _
    %p507 = scmp.le.s32.totalorder 2, %s11
    // Predicated region
    $region45: #{basic_block.2} parent=5 // pred_check
      %p508 = pneg %p507
    $region46: #{basic_block.2} parent=5 // pred_check_branch
      %510 = sbr.rel (%p508) target = $region48
    $region47: #{basic_block.2} parent=5 // pred_region
      %s511 = ssub.s32 %s11, 2
      // Predicated region
      $region49: #{basic_block.2} parent=47 // pred_check
        %p512 = pneg %p122
      $region50: #{basic_block.2} parent=47 // pred_check_branch
        %514 = sbr.rel (%p512) target = $region52
      $region51: #{basic_block.2} parent=47 // pred_region
        %p515 = scmp.lt.s32.totalorder %s22, 1
        %s516 = scalar_select %p515, %s22, 1
        %s517 = smul.addr %s516, 8
        %s518 = scalar_lea.vmem %s3, %s517
      $region52: #{basic_block.2} parent=47 // pred_fallthru
        _
      // Predicated region
      $region53: #{basic_block.2} parent=47 // pred_check
        %p519 = pneg %p148
      $region54: #{basic_block.2} parent=47 // pred_check_branch
        %521 = sbr.rel (%p519) target = $region56
      $region55: #{basic_block.2} parent=47 // pred_region
        %p522 = scmp.lt.s32.totalorder %s22, 1
        %s523 = scalar_select %p522, %s22, 1
        %s524 = smul.addr %s523, 8
        %s525 = scalar_lea.vmem %s4, %s524
      $region56: #{basic_block.2} parent=47 // pred_fallthru
        _
    $region48: #{basic_block.2} parent=5 // pred_fallthru
      _
  $region6: #{basic_block.2} parent=0 // loop_footer
    %s15 = sadd.s32 1, %s11
  $region7: #{basic_block.2} parent=0 // loop_footer_branch
    %10 = sbr.rel target = $region3
  $region8: #{basic_block.2} parent=0 // loop_exit
    _

</llo_original>
